<compile_context>
chip_gen: v6e
topology: v6e:2x2x1
jax: 0.10.0
libtpu: 0.0.40
codegen_flags: <defaults>
</compile_context>

<pallas_src>
import jax
import jax.numpy as jnp
from jax.experimental import pallas as pl
from jax.experimental.pallas import tpu as pltpu

_MAX_TILE_BYTES = 4 * 1024 * 1024          # per-buffer tile cap (pre-double-buffer)
_HARD_VMEM_BYTES = 48 * 1024 * 1024        # never request more scoped VMEM than this
_OVERSIZE_FOOTPRINT_BYTES = 40 * 1024 * 1024  # cap for awkward-factorization tiles
_LANE_FLOOR = 512                          # avoid the 128-wide tile cliff


def _cdiv(a: int, b: int) -> int:
    return -(-a // b)


def _round_up(a: int, b: int) -> int:
    return _cdiv(a, b) * b


def _sublanes(itemsize: int) -> int:
    # Sub-32-bit dtypes pack along sublanes: f32 -> 8, bf16 -> 16, int8/fp8 -> 32.
    return max(8, 32 // itemsize)


def _feature_gate_kernel(a_ref, b_ref, o_ref):
    # Both refs are already the correct channel-half tiles (split is done by
    # the BlockSpec index_maps); pure elementwise gate on the VPU.
    o_ref[...] = a_ref[...] * b_ref[...]


def _feature_gate_rowsplit_kernel(x_ref, o_ref):
    # Fallback for half-widths not divisible by 128: rows are tiled by the
    # grid, the channel split happens in-kernel (static unaligned slice).
    half = o_ref.shape[-1]
    o_ref[...] = x_ref[:, :half] * x_ref[:, half:]


def _pick_tiles(n: int, half_cols: int, itemsize: int):
    """Pick (rows_tile, padded_rows, col_tile, col_blocks) for the tiled path."""
    sublane = _sublanes(itemsize)
    lane_floor = min(_LANE_FLOOR, half_cols)

    rows_tile = n if n <= sublane else sublane
    padded_rows = _round_up(rows_tile, sublane)     # real VMEM footprint rows

    budget_elems = max(128, _MAX_TILE_BYTES // (padded_rows * itemsize))

    # All column-tile candidates: multiples of 128 dividing half_cols.
    cands = [c for c in range(128, half_cols + 1, 128) if half_cols % c == 0]
    fits = [c for c in cands if c <= budget_elems]
    good = [c for c in fits if c >= lane_floor]
    if good:
        col_tile = max(good)
    else:
        # Awkward factorization: prefer the smallest candidate >= the lane
        # floor (over budget, covered by vmem_limit_bytes) over collapsing to
        # 128-wide tiles.
        col_tile = None
        over = [c for c in cands if c >= lane_floor]
        if over:
            c = min(over)
            if 6 * padded_rows * c * itemsize <= _OVERSIZE_FOOTPRINT_BYTES:
                col_tile = c
        if col_tile is None:
            col_tile = max(fits)   # fits always contains 128

    col_blocks = half_cols // col_tile

    # Grow rows_tile (doubling) to amortize grid-step overhead, staying under
    # the per-buffer byte budget and keeping >=2 total grid steps (v7x
    # megacore) whenever we already have them.
    def steps(rt: int) -> int:
        return _cdiv(n, rt) * col_blocks

    while rows_tile < n:
        new_rt = min(n, rows_tile * 2)
        new_padded = _round_up(new_rt, sublane)
        if new_padded * col_tile * itemsize > _MAX_TILE_BYTES:
            break
        if steps(new_rt) < 2 <= steps(rows_tile):
            break
        rows_tile, padded_rows = new_rt, new_padded

    # v7x megacore: if a non-trivial tensor ended up as a single grid step,
    # split the columns once so both TensorCores get work.
    if steps(rows_tile) == 1 and padded_rows * col_tile * itemsize >= (512 << 10):
        smaller = [c for c in cands if lane_floor <= c < col_tile]
        if smaller:
            col_tile = max(smaller)
            col_blocks = half_cols // col_tile

    return rows_tile, padded_rows, col_tile, col_blocks


def feature_gate(x: jax.Array) -> jax.Array:
    """FeatureGate forward. x: (N, C, H, W) -> (N, C//2, H, W)."""
    n, c, h, w = x.shape
    assert c % 2 == 0, "in_channels must be even"
    half_cols = (c // 2) * h * w
    total_cols = c * h * w
    itemsize = jnp.dtype(x.dtype).itemsize

    # Free reshape for row-major NCHW: each sample's two channel halves are
    # two contiguous column ranges of length half_cols.
    x2d = x.reshape(n, total_cols)
    out2d_shape = jax.ShapeDtypeStruct((n, half_cols), x.dtype)
    cost = pl.CostEstimate(
        flops=n * half_cols,
        transcendentals=0,
        bytes_accessed=(n * total_cols + n * half_cols) * itemsize,
    )

    if half_cols % 128 == 0:
        rows_tile, padded_rows, col_tile, col_blocks = _pick_tiles(
            n, half_cols, itemsize)
        grid = (_cdiv(n, rows_tile), col_blocks)
        tile_bytes = padded_rows * col_tile * itemsize
        # 2 inputs + 1 output, double-buffered = 6 live tiles; 1.5x slack.
        vmem_limit = int(min(_HARD_VMEM_BYTES,
                             max(32 << 20, (6 * tile_bytes * 3) // 2)))

        out2d = pl.pallas_call(
            _feature_gate_kernel,
            out_shape=out2d_shape,
            grid=grid,
            in_specs=[
                # First channel half: column blocks [0, col_blocks).
                pl.BlockSpec((rows_tile, col_tile), lambda i, j: (i, j)),
                # Second channel half: same rows, column blocks offset by one
                # half's worth of blocks (the split happens here).
                pl.BlockSpec((rows_tile, col_tile),
                             lambda i, j: (i, j + col_blocks)),
            ],
            out_specs=pl.BlockSpec((rows_tile, col_tile), lambda i, j: (i, j)),
            compiler_params=pltpu.CompilerParams(
                dimension_semantics=("parallel", "parallel"),
                vmem_limit_bytes=vmem_limit,
            ),
            cost_estimate=cost,
        )(x2d, x2d)
    else:
        # Row-tiled fallback (e.g. 7x7 feature maps): block last dims equal
        # the full array widths (exempt from the (8,128) rule); the unaligned
        # in-kernel slice costs a relayout but stays VMEM-safe for any N.
        # TODO(synk): a single row footprint > ~8 MiB would still exceed the
        # VMEM cap here; pad H*W to a multiple of 128 upstream if such shapes
        # ever appear.
        sublane = _sublanes(itemsize)
        per_row_bytes = (total_cols + half_cols) * itemsize
        max_rows = max(1, _MAX_TILE_BYTES // per_row_bytes)
        if n <= max_rows:
            rows_tile = n
        else:
            rows_tile = max(sublane, (max_rows // sublane) * sublane)
        padded_rows = _round_up(rows_tile, sublane)
        grid = (_cdiv(n, rows_tile),)
        vmem_limit = int(min(_HARD_VMEM_BYTES,
                             max(32 << 20,
                                 2 * 2 * padded_rows
                                 * (total_cols + half_cols) * itemsize)))

        out2d = pl.pallas_call(
            _feature_gate_rowsplit_kernel,
            out_shape=out2d_shape,
            grid=grid,
            in_specs=[pl.BlockSpec((rows_tile, total_cols), lambda i: (i, 0))],
            out_specs=pl.BlockSpec((rows_tile, half_cols), lambda i: (i, 0)),
            compiler_params=pltpu.CompilerParams(
                dimension_semantics=("parallel",),
                vmem_limit_bytes=vmem_limit,
            ),
            cost_estimate=cost,
        )(x2d)

    return out2d.reshape(n, c // 2, h, w)


if __name__ == "__main__":
    key = jax.random.PRNGKey(0)
    N, C, H, W = 2, 4, 16, 16  # FeatureGate(in_channels=4)
    x = jax.random.normal(key, (N, C, H, W), dtype=jnp.float32)

    out = feature_gate(x)
    jax.block_until_ready(out)

    # Reference check against plain JAX (same as the PyTorch forward).
    ref = x[:, : C // 2] * x[:, C // 2 :]
    assert out.shape == (N, C // 2, H, W)
    assert jnp.allclose(out, ref, atol=1e-6, rtol=1e-6)

    print("KERNEL_OK")
</pallas_src>

<mosaic_0001>
module attributes {stable_mosaic.version = 11 : i64} {
  func.func @_feature_gate_kernel(%arg0: i32, %arg1: i32, %arg2: memref<2x512xf32, #tpu.memory_space<vmem>>, %arg3: memref<2x512xf32, #tpu.memory_space<vmem>>, %arg4: memref<2x512xf32, #tpu.memory_space<vmem>>) attributes {dimension_semantics = [#tpu.dimension_semantics<parallel>, #tpu.dimension_semantics<parallel>], iteration_bounds = array<i64: 1, 1>, scalar_prefetch = 0 : i64, scratch_operands = 0 : i64, tpu.core_type = #tpu.core_type<tc>, window_params = [{transform_indices = @transform_0, window_bounds = array<i64: 2, 512>}, {transform_indices = @transform_1, window_bounds = array<i64: 2, 512>}, {transform_indices = @transform_2, window_bounds = array<i64: 2, 512>}]} {
    %c0 = arith.constant 0 : index
    %c0_0 = arith.constant 0 : index
    %0 = vector.load %arg2[%c0, %c0_0] : memref<2x512xf32, #tpu.memory_space<vmem>>, vector<2x512xf32>
    %c0_1 = arith.constant 0 : index
    %c0_2 = arith.constant 0 : index
    %1 = vector.load %arg3[%c0_1, %c0_2] : memref<2x512xf32, #tpu.memory_space<vmem>>, vector<2x512xf32>
    %2 = arith.mulf %0, %1 : vector<2x512xf32>
    %c0_3 = arith.constant 0 : index
    %c0_4 = arith.constant 0 : index
    %3 = vector.load %arg4[%c0_3, %c0_4] : memref<2x512xf32, #tpu.memory_space<vmem>>, vector<2x512xf32>
    tpu.vector_store %arg4[%c0_3, %c0_4], %2 {strides = array<i32>} : memref<2x512xf32, #tpu.memory_space<vmem>>, vector<2x512xf32>,
    return
  }
  func.func @transform_0(%arg0: i32, %arg1: i32) -> (i32, i32) {
    %c0_i32 = arith.constant 0 : i32
    return %arg0, %arg1 : i32, i32
  }
  func.func @transform_1(%arg0: i32, %arg1: i32) -> (i32, i32) {
    %c1_i32 = arith.constant 1 : i32
    %0 = arith.addi %arg1, %c1_i32 : i32
    %c0_i32 = arith.constant 0 : i32
    return %arg0, %0 : i32, i32
  }
  func.func @transform_2(%arg0: i32, %arg1: i32) -> (i32, i32) {
    %c0_i32 = arith.constant 0 : i32
    return %arg0, %arg1 : i32, i32
  }
}

</mosaic_0001>

<llo_original>
// kernel: tpu_custom_call.1
$region0: #{tpu_custom_call.1}
  #allocation0 [shape = 'u32[]', space=smem, size = 0x4, offset = 0x4, fixed_abs, tag = 'smem constant byte address 0x4 - core index']
  #allocation1 [shape = 'u32[144,128]{1,0:T(1,128)}', space=vmem, size = 0x12000, scoped, tag = 'internal scratch']
  %s0 = inlined_call_operand.hbm [shape: f32[2,1024], index: 0, kind: input, shape index: {}]
  %s1 = inlined_call_operand.hbm [shape: f32[2,1024], index: 1, kind: input, shape index: {}]
  %s2 = inlined_call_operand.hbm [shape: f32[2,512], index: 2, kind: output, shape index: {}]
  %s3 = sld [smem:[#allocation0]]
  $region26: #{tpu_custom_call.1} parent=0
    _
  %s5 = ssub.s32 1, %s3
  %s6 = scalar_select 0, %s5, %s3
  $region1: #{tpu_custom_call.1} parent=0
    #allocation2 [shape = 'u8[4096]{0}', space=vmem, size = 0x1000, scoped, tag = 'input window, operand 0, single buffered']
    #allocation3 [shape = 's32[1]{0}', space=sflag, size = 0x4, scoped, tag = 'scoped memory for tpu_custom_call.1']
    #allocation4 [shape = 's32[1]{0}', space=sflag, size = 0x4, scoped, tag = 'scoped memory for tpu_custom_call.1']
    #allocation5 [shape = 'u8[4096]{0}', space=vmem, size = 0x1000, scoped, tag = 'input window, operand 1, single buffered']
    #allocation6 [shape = 's32[1]{0}', space=sflag, size = 0x4, scoped, tag = 'scoped memory for tpu_custom_call.1']
    #allocation7 [shape = 'u8[4096]{0}', space=vmem, size = 0x1000, scoped, tag = 'output window, operand 0, single buffered']
    %7 = vsyncpa [#allocation3], 0
    %8 = vsyncpa [#allocation6], 0
    %9 = vsyncpa [#allocation4], 0
    // Predicated region
    $region2: #{tpu_custom_call.1} parent=1 // pred_check
      _
    $region3: #{tpu_custom_call.1} parent=1 // pred_check_branch
      %11 = sbr.rel (0) target = $region5
    $region4: #{tpu_custom_call.1} parent=1 // pred_region
      %s13 = ssub.s32 128, 128
      %14 = vsyncadd [#allocation3], %s13
      %s16 = sshll.u32 [#allocation2], 4
      %s17 = int_to_ptr.vmem [resolvable:$true] %s16
      %19 = dma.hbm_to_vmem [thread:$0]  %s0, 128, %s17, [#allocation3]
    $region5: #{tpu_custom_call.1} parent=1 // pred_fallthru
      _
    // Predicated region
    $region6: #{tpu_custom_call.1} parent=1 // pred_check
      _
    $region7: #{tpu_custom_call.1} parent=1 // pred_check_branch
      %21 = sbr.rel (0) target = $region9
    $region8: #{tpu_custom_call.1} parent=1 // pred_region
      %s22 = sadd.s32 0, 1
      %s23 = smul.u32 4, %s22
      %s25 = ssub.s32 128, 128
      %26 = vsyncadd [#allocation6], %s25
      %s27 = smul.addr %s23, 32
      %s28 = scalar_lea.hbm %s1, %s27
      %s30 = sshll.u32 [#allocation5], 4
      %s31 = int_to_ptr.vmem [resolvable:$true] %s30
      %33 = dma.hbm_to_vmem [thread:$0]  %s28, 128, %s31, [#allocation6]
    $region9: #{tpu_custom_call.1} parent=1 // pred_fallthru
      _
    // Predicated region
    $region10: #{tpu_custom_call.1} parent=1 // pred_check
      _
    $region11: #{tpu_custom_call.1} parent=1 // pred_check_branch
      %35 = sbr.rel (0) target = $region13
    $region12: #{tpu_custom_call.1} parent=1 // pred_region
      %36 = dma.done [#allocation3], 128
    $region13: #{tpu_custom_call.1} parent=1 // pred_fallthru
      _
    // Predicated region
    $region14: #{tpu_custom_call.1} parent=1 // pred_check
      _
    $region15: #{tpu_custom_call.1} parent=1 // pred_check_branch
      %38 = sbr.rel (0) target = $region17
    $region16: #{tpu_custom_call.1} parent=1 // pred_region
      %39 = dma.done [#allocation6], 128
    $region17: #{tpu_custom_call.1} parent=1 // pred_fallthru
      _
    %s40 = sadd.s32 0, 1
    %s41 = smul.u32 4, %s40
    %v42 = vld [vmem:[#allocation2] sm:$0xff]
    %v43 = vld [vmem:[#allocation5] sm:$0xff]
    %v44 = vmul.f32 %v42, %v43
    %45 = vst [vmem:[#allocation7] sm:$0xff] %v44
    // Predicated region
    $region18: #{tpu_custom_call.1} parent=1 // pred_check
      _
    $region19: #{tpu_custom_call.1} parent=1 // pred_check_branch
      %47 = sbr.rel (0) target = $region21
    $region20: #{tpu_custom_call.1} parent=1 // pred_region
      %s49 = ssub.s32 128, 128
      %50 = vsyncadd [#allocation4], %s49
      %s52 = sshll.u32 [#allocation7], 4
      %s53 = int_to_ptr.vmem [resolvable:$true] %s52
      %55 = dma.vmem_to_hbm [thread:$0]  %s53, 128, %s2, [#allocation4]
    $region21: #{tpu_custom_call.1} parent=1 // pred_fallthru
      _
    // Predicated region
    $region22: #{tpu_custom_call.1} parent=1 // pred_check
      _
    $region23: #{tpu_custom_call.1} parent=1 // pred_check_branch
      %57 = sbr.rel (0) target = $region25
    $region24: #{tpu_custom_call.1} parent=1 // pred_region
      %58 = dma.done [#allocation4], 128
    $region25: #{tpu_custom_call.1} parent=1 // pred_fallthru
      _
    %59 = vsyncpa [#allocation3], 1
    %60 = vsyncpa [#allocation6], 1
    %61 = vsyncpa [#allocation4], 1

</llo_original>
